<compile_context>
chip_gen: v5e
topology: v5e:2x2
jax: 0.10.0
libtpu: 0.0.40
codegen_flags: <defaults>
</compile_context>

<pallas_src>
import jax
import jax.numpy as jnp
from jax.experimental import pallas as pl
from jax.experimental.pallas import tpu as pltpu


def _graphsage_head_kernel(w_ref, emb_ref, out_ref):
    # w_ref:   (C, D)   bf16  (VMEM-resident, constant index_map)
    # emb_ref: (D, tn)  bf16  (node tile)
    # out_ref: (C, tn)  f32   (lane-dense: tn >= 128 lanes -> unmasked stores)
    out_ref[...] = jnp.dot(
        w_ref[...], emb_ref[...],
        preferred_element_type=jnp.float32,
    ).astype(out_ref.dtype)


def supervised_graphsage_forward(embeds, weight, *, tn=512,
                                 compute_dtype=jnp.bfloat16):
    """embeds: (D, N), weight: (C, D) -> scores.t(): (N, C) f32.

    Computes (weight @ embeds).T.  Internally produces a node-tiled (C, N) slab
    (lane-dense stores) and transposes once in the wrapper.
    """
    D, N = embeds.shape
    C, D2 = weight.shape
    assert D == D2, f"embed_dim mismatch: {D} vs {D2}"
    assert tn % 128 == 0, "node tile must be lane-aligned (multiple of 128)"

    # Don't tile wider than needed for tiny node batches (still lane-aligned).
    tn = min(tn, max(128, pl.cdiv(N, 128) * 128))

    # Pad the node axis up to a multiple of the tile so arbitrary N works.
    n_pad = pl.cdiv(N, tn) * tn
    if n_pad != N:
        embeds = jnp.pad(embeds, ((0, 0), (0, n_pad - N)))

    emb = embeds.astype(compute_dtype)
    w = weight.astype(compute_dtype)

    # VMEM per step (double-buffered):
    #   2 * D * tn * 2B (embeds) + C * D * 2B (weight, resident) + 2 * C * tn * 4B (out)
    # With D=128, tn=512, C=8 this is well under 1 MiB -> no vmem_limit override needed.
    scores_cn = pl.pallas_call(
        _graphsage_head_kernel,
        out_shape=jax.ShapeDtypeStruct((C, n_pad), jnp.float32),
        grid_spec=pl.GridSpec(
            grid=(n_pad // tn,),
            in_specs=[
                # full classifier weight, constant index -> stays VMEM-resident
                pl.BlockSpec((C, D), lambda i: (0, 0)),
                # node tile of embeddings
                pl.BlockSpec((D, tn), lambda i: (0, i)),
            ],
            out_specs=pl.BlockSpec((C, tn), lambda i: (0, i)),
        ),
        compiler_params=pltpu.CompilerParams(
            dimension_semantics=("parallel",),
        ),
    )(w, emb)

    # Trim padding and emit scores.t() = (N, C); the (C, N) transpose of the small
    # score slab is a trivial XLA op next to the (D, N) embedding read.
    return scores_cn[:, :N].T


def xavier_uniform(key, shape, dtype=jnp.float32):
    # torch.nn.init.xavier_uniform on a (num_classes, embed_dim) tensor:
    # fan_in = embed_dim, fan_out = num_classes
    fan_out, fan_in = shape
    bound = (6.0 / (fan_in + fan_out)) ** 0.5
    return jax.random.uniform(key, shape, dtype, minval=-bound, maxval=bound)


if __name__ == "__main__":
    num_classes = 8     # label count (cora uses 7; 8 keeps sublane tiles clean)
    embed_dim = 128     # enc.embed_dim
    num_nodes = 1024    # batch of nodes -> 2 tiles of 512 (keeps both v7x TCs busy)

    key = jax.random.PRNGKey(0)
    k_w, k_e = jax.random.split(key)

    # Deterministic parameter init (mirrors nn.Parameter + xavier_uniform in __init__).
    weight = xavier_uniform(k_w, (num_classes, embed_dim))
    # Synthetic encoder output embeds = enc(nodes), shape (embed_dim, num_nodes).
    embeds = jax.random.normal(k_e, (embed_dim, num_nodes), dtype=jnp.float32)

    scores_t = supervised_graphsage_forward(embeds, weight)
    scores_t = jax.block_until_ready(scores_t)

    # Reference at the same bf16 input precision (f32 accumulate), so we check the
    # kernel's math/layout rather than the intentional bf16 quantization of inputs.
    w_q = weight.astype(jnp.bfloat16).astype(jnp.float32)
    e_q = embeds.astype(jnp.bfloat16).astype(jnp.float32)
    ref = (w_q @ e_q).T

    assert scores_t.shape == (num_nodes, num_classes)
    assert jnp.allclose(scores_t, ref, atol=1e-3, rtol=1e-3)

    print("KERNEL_OK")
</pallas_src>

<mosaic_0001>
module attributes {stable_mosaic.version = 11 : i64} {
  func.func @_graphsage_head_kernel(%arg0: i32, %arg1: memref<8x128xbf16, #tpu.memory_space<vmem>>, %arg2: memref<128x512xbf16, #tpu.memory_space<vmem>>, %arg3: memref<8x512xf32, #tpu.memory_space<vmem>>) attributes {dimension_semantics = [#tpu.dimension_semantics<parallel>], iteration_bounds = array<i64: 2>, scalar_prefetch = 0 : i64, scratch_operands = 0 : i64, tpu.core_type = #tpu.core_type<tc>, window_params = [{pipeline_mode = #tpu.pipeline_mode<synchronous>, transform_indices = @transform_0, window_bounds = array<i64: 8, 128>}, {transform_indices = @transform_1, window_bounds = array<i64: 128, 512>}, {transform_indices = @transform_2, window_bounds = array<i64: 8, 512>}]} {
    %c0 = arith.constant 0 : index
    %c0_0 = arith.constant 0 : index
    %0 = vector.load %arg1[%c0, %c0_0] : memref<8x128xbf16, #tpu.memory_space<vmem>>, vector<8x128xbf16>
    %c0_1 = arith.constant 0 : index
    %c0_2 = arith.constant 0 : index
    %1 = vector.load %arg2[%c0_1, %c0_2] : memref<128x512xbf16, #tpu.memory_space<vmem>>, vector<128x512xbf16>
    %cst = arith.constant dense<0.000000e+00> : vector<8x512xf32>
    %2 = tpu.matmul %0, %1, %cst {dimension_numbers = #tpu.dot_dimension_numbers<[1], [0], [0], [1], [0, 0, 1, 1], [], []>} : vector<8x128xbf16>, vector<128x512xbf16>, vector<8x512xf32> -> vector<8x512xf32>
    %c0_3 = arith.constant 0 : index
    %c0_4 = arith.constant 0 : index
    %3 = vector.load %arg3[%c0_3, %c0_4] : memref<8x512xf32, #tpu.memory_space<vmem>>, vector<8x512xf32>
    tpu.vector_store %arg3[%c0_3, %c0_4], %2 {strides = array<i32>} : memref<8x512xf32, #tpu.memory_space<vmem>>, vector<8x512xf32>,
    return
  }
  func.func @transform_0(%arg0: i32) -> (i32, i32) {
    %c0_i32 = arith.constant 0 : i32
    %c0_i32_0 = arith.constant 0 : i32
    %c0_i32_1 = arith.constant 0 : i32
    return %c0_i32, %c0_i32_0 : i32, i32
  }
  func.func @transform_1(%arg0: i32) -> (i32, i32) {
    %c0_i32 = arith.constant 0 : i32
    %c0_i32_0 = arith.constant 0 : i32
    return %c0_i32, %arg0 : i32, i32
  }
  func.func @transform_2(%arg0: i32) -> (i32, i32) {
    %c0_i32 = arith.constant 0 : i32
    %c0_i32_0 = arith.constant 0 : i32
    return %c0_i32, %arg0 : i32, i32
  }
}

</mosaic_0001>

<llo_original>
// kernel: tpu_custom_call.1
$region0: #{tpu_custom_call.1}
  #allocation0 [shape = 'u32[]', space=smem, size = 0x4, offset = 0x4, fixed_abs, tag = 'smem constant byte address 0x4 - core index']
  #allocation1 [shape = 'u32[72,128]{1,0:T(1,128)}', space=vmem, size = 0x9000, scoped, tag = 'internal scratch']
  %s0 = inlined_call_operand.hbm [shape: bf16[8,128], index: 0, kind: input, shape index: {}]
  %s1 = inlined_call_operand.hbm [shape: bf16[128,1024], index: 1, kind: input, shape index: {}]
  %s2 = inlined_call_operand.hbm [shape: f32[8,1024], index: 2, kind: output, shape index: {}]
  %s3 = sld [smem:[#allocation0]]
  $region49: #{tpu_custom_call.1} parent=0
    _
  %s5 = ssub.s32 1, %s3
  %s6 = scalar_select 0, %s5, %s3
  $region1: #{tpu_custom_call.1} parent=0
    #allocation2 [shape = 'u8[2048]{0}', space=vmem, size = 0x800, scoped, tag = 'input window, operand 0, single buffered']
    #allocation3 [shape = 's32[2]{0}', space=sflag, size = 0x8, scoped, tag = 'scoped memory for tpu_custom_call.1']
    #allocation4 [shape = 's32[2]{0}', space=sflag, size = 0x8, scoped, tag = 'scoped memory for tpu_custom_call.1']
    #allocation5 [shape = 'u8[262144]{0}', space=vmem, size = 0x40000, scoped, tag = 'input window, operand 1']
    #allocation6 [shape = 's32[2]{0}', space=sflag, size = 0x8, scoped, tag = 'scoped memory for tpu_custom_call.1']
    #allocation7 [shape = 'u8[32768]{0}', space=vmem, size = 0x8000, scoped, tag = 'output window, operand 0']
    %7 = vsyncpa [#allocation3], 0
    %8 = vsyncpa [#allocation6], 0
    %s9 = scalar_lea.sflag [#allocation6], 1
    %10 = vsyncpa %s9, 0
    %11 = vsyncpa [#allocation4], 0
    %s12 = scalar_lea.sflag [#allocation4], 1
    %13 = vsyncpa %s12, 0
    loop: start=0, step=1, limit=4
    $region2: #{tpu_custom_call.1} parent=1 // loop_pre_header
      _
    $region3: #{tpu_custom_call.1} parent=1 // loop_header
      %s15 = sphi 0, %s19
      %p16 = scmp.ge.s32.totalorder %s15, 4
      %s23 = sphi 0, %s23
      %s25 = sphi 0, %s23
      %s26 = sphi 0, %s25
      %s40 = sphi 0, %s26
      %s46 = sphi 0, %s48
      %s49 = sphi 0, %s46
      %s50 = sphi 0, %s49
      %s66 = sphi 0, %s50
      %s72 = sphi 0, %s74
      %s75 = sphi 0, %s72
      %s76 = sphi 0, %s75
      %s92 = sphi 0, %s76
    $region4: #{tpu_custom_call.1} parent=1 // loop_header_branch
      %18 = sbr.rel (%p16) target = $region8
    $region5: #{tpu_custom_call.1} parent=1 // loop_body
      %s20 = ssub.s32 %s15, 1
      %s21 = ssub.s32 %s15, 2
      %s22 = sadd.s32 %s15, 1
      %s24 = sadd.s32 %s23, 1
      %p27 = scmp.eq.s32.totalorder %s15, 1
      %p28 = scmp.ne.s32.totalorder %s23, %s25
      %p29 = scmp.eq.s32.totalorder %s15, 0
      %p30 = por %p28, %p29
      %p31 = scmp.ne.s32.totalorder %s23, %s25
      %p32 = scmp.eq.s32.totalorder %s20, 1
      %p33 = por %p31, %p32
      %p34 = scmp.ne.s32.totalorder %s25, %s26
      %p35 = scmp.eq.s32.totalorder %s20, 0
      %p36 = por %p34, %p35
      %p37 = scmp.ne.s32.totalorder %s25, %s26
      %p38 = scmp.eq.s32.totalorder %s21, 1
      %p39 = por %p37, %p38
      %p41 = scmp.ne.s32.totalorder %s26, %s40
      %p42 = scmp.eq.s32.totalorder %s21, 0
      %p43 = por %p41, %p42
      %s44 = ssub.s32 %s15, %s22
      %p45 = scmp.eq.s32.totalorder %s44, 0
      %s47 = sadd.s32 %s46, 1
      %s48 = scalar_select %p45, %s46, %s47
      %p51 = pneg %p45
      %p52 = scmp.eq.s32.totalorder %s15, 1
      %p53 = por %p51, %p52
      %p54 = scmp.ne.s32.totalorder %s46, %s49
      %p55 = scmp.eq.s32.totalorder %s15, 0
      %p56 = por %p54, %p55
      %p57 = scmp.ne.s32.totalorder %s46, %s49
      %p58 = scmp.eq.s32.totalorder %s20, 1
      %p59 = por %p57, %p58
      %p60 = scmp.ne.s32.totalorder %s49, %s50
      %p61 = scmp.eq.s32.totalorder %s20, 0
      %p62 = por %p60, %p61
      %p63 = scmp.ne.s32.totalorder %s49, %s50
      %p64 = scmp.eq.s32.totalorder %s21, 1
      %p65 = por %p63, %p64
      %p67 = scmp.ne.s32.totalorder %s50, %s66
      %p68 = scmp.eq.s32.totalorder %s21, 0
      %p69 = por %p67, %p68
      %s70 = ssub.s32 %s15, %s22
      %p71 = scmp.eq.s32.totalorder %s70, 0
      %s73 = sadd.s32 %s72, 1
      %s74 = scalar_select %p71, %s72, %s73
      %p77 = pneg %p71
      %p78 = scmp.eq.s32.totalorder %s15, 1
      %p79 = por %p77, %p78
      %p80 = scmp.ne.s32.totalorder %s72, %s75
      %p81 = scmp.eq.s32.totalorder %s15, 0
      %p82 = por %p80, %p81
      %p83 = scmp.ne.s32.totalorder %s72, %s75
      %p84 = scmp.eq.s32.totalorder %s20, 1
      %p85 = por %p83, %p84
      %p86 = scmp.ne.s32.totalorder %s75, %s76
      %p87 = scmp.eq.s32.totalorder %s20, 0
      %p88 = por %p86, %p87
      %p89 = scmp.ne.s32.totalorder %s75, %s76
      %p90 = scmp.eq.s32.totalorder %s21, 1
      %p91 = por %p89, %p90
      %p93 = scmp.ne.s32.totalorder %s76, %s92
      %p94 = scmp.eq.s32.totalorder %s21, 0
      %p95 = por %p93, %p94
      %p96 = scmp.le.s32.totalorder 1, %s15
      %p97 = scmp.lt.s32.totalorder %s15, 3
      %p98 = pnand %p96, %p97
      %p99 = pneg %p98
      // Predicated region
      $region9: #{tpu_custom_call.1} parent=5 // pred_check
        _
      $region10: #{tpu_custom_call.1} parent=5 // pred_check_branch
        %101 = sbr.rel (%p98) target = $region12
      $region11: #{tpu_custom_call.1} parent=5 // pred_region
        %s102 = ssub.s32 %s15, 1
        // Predicated region
        $region13: #{tpu_custom_call.1} parent=11 // pred_check
          %p103 = pneg %p36
        $region14: #{tpu_custom_call.1} parent=11 // pred_check_branch
          %105 = sbr.rel (%p103) target = $region16
        $region15: #{tpu_custom_call.1} parent=11 // pred_region
          %107 = vsyncadd [#allocation3], 0
          %s109 = sshll.u32 %s0, 4
          %s110 = int_to_ptr.hbm [resolvable:$true] %s109
          %s111 = sshll.u32 [#allocation2], 4
          %s112 = int_to_ptr.vmem [resolvable:$true] %s111
          %114 = dma.hbm_to_vmem [thread:$0]  %s110, 64, %s112, [#allocation3]
        $region16: #{tpu_custom_call.1} parent=11 // pred_fallthru
          _
      $region12: #{tpu_custom_call.1} parent=5 // pred_fallthru
        _
      %p115 = scmp.lt.s32.totalorder %s15, 2
      // Predicated region
      $region17: #{tpu_custom_call.1} parent=5 // pred_check
        %p116 = pneg %p115
      $region18: #{tpu_custom_call.1} parent=5 // pred_check_branch
        %118 = sbr.rel (%p116) target = $region20
      $region19: #{tpu_custom_call.1} parent=5 // pred_region
        // Predicated region
        $region21: #{tpu_custom_call.1} parent=19 // pred_check
          %p119 = pneg %p56
        $region22: #{tpu_custom_call.1} parent=19 // pred_check_branch
          %121 = sbr.rel (%p119) target = $region24
        $region23: #{tpu_custom_call.1} parent=19 // pred_region
          %s122 = sand.u32 %s46, 1
          %s123 = scalar_lea.sflag [#allocation6], %s122
          %s124 = sand.u32 %s46, 1
          %s125 = smul.addr %s124, 256
          %s126 = scalar_lea.vmem [#allocation5], %s125
          %s127 = smul.u32 4, %s15
          %129 = vsyncadd %s123, 0
          %s130 = smul.addr %s127, 4
          %s131 = scalar_lea.hbm %s1, %s130
          %s132 = sshll.u32 %s131, 4
          %s133 = int_to_ptr.hbm [resolvable:$true] %s132
          %s134 = sshll.u32 %s126, 4
          %s135 = int_to_ptr.vmem [resolvable:$true] %s134
          %140 = dma.hbm_to_vmem [thread:$0]  %s133, 4096, %s135, %s123, 512, 256, 16
        $region24: #{tpu_custom_call.1} parent=19 // pred_fallthru
          _
      $region20: #{tpu_custom_call.1} parent=5 // pred_fallthru
        _
      %p141 = scmp.le.s32.totalorder 1, %s15
      %p142 = scmp.lt.s32.totalorder %s15, 3
      %p143 = pnand %p141, %p142
      %p144 = pneg %p143
      // Predicated region
      $region25: #{tpu_custom_call.1} parent=5 // pred_check
        _
      $region26: #{tpu_custom_call.1} parent=5 // pred_check_branch
        %146 = sbr.rel (%p143) target = $region28
      $region27: #{tpu_custom_call.1} parent=5 // pred_region
        %s147 = ssub.s32 %s15, 1
        // Predicated region
        $region29: #{tpu_custom_call.1} parent=27 // pred_check
          %p148 = pneg %p36
        $region30: #{tpu_custom_call.1} parent=27 // pred_check_branch
          %150 = sbr.rel (%p148) target = $region32
        $region31: #{tpu_custom_call.1} parent=27 // pred_region
          %152 = dma.done [#allocation3], 64
        $region32: #{tpu_custom_call.1} parent=27 // pred_fallthru
          _
        %s153 = sand.u32 %s49, 1
        %s154 = scalar_lea.sflag [#allocation6], %s153
        %s155 = sand.u32 %s49, 1
        %s156 = smul.addr %s155, 256
        %s157 = scalar_lea.vmem [#allocation5], %s156
        // Predicated region
        $region33: #{tpu_custom_call.1} parent=27 // pred_check
          %p158 = pneg %p62
        $region34: #{tpu_custom_call.1} parent=27 // pred_check_branch
          %160 = sbr.rel (%p158) target = $region36
        $region35: #{tpu_custom_call.1} parent=27 // pred_region
          %162 = dma.done %s154, 4096
        $region36: #{tpu_custom_call.1} parent=27 // pred_fallthru
          _
        %p163 = pneg %p36
        %p164 = pneg %p33
        %s165 = sand.u32 %s49, 1
        %s166 = scalar_lea.sflag [#allocation6], %s165
        %s167 = sand.u32 %s49, 1
        %s168 = smul.addr %s167, 256
        %s169 = scalar_lea.vmem [#allocation5], %s168
        %p170 = pneg %p62
        %p171 = pneg %p59
        %p172 = pneg %p88
        %p173 = pneg %p85
        %s174 = sand.u32 %s75, 1
        %s175 = scalar_lea.sflag [#allocation4], %s174
        %s176 = sand.u32 %s75, 1
        %s177 = smul.addr %s176, 32
        %s178 = scalar_lea.vmem [#allocation7], %s177
        %s179 = smul.u32 4, %s20
        %s180 = smul.u32 4, %s20
        %v181 = vld [vmem:[#allocation2] sm:$0xf]
        %v182 = vld [vmem:[%s157] sm:$0xff]
        %v183 = vld [vmem:[%s157 + $0x8] sm:$0xff]
        %v184 = vld [vmem:[%s157 + $0x10] sm:$0xff]
        %v185 = vld [vmem:[%s157 + $0x18] sm:$0xff]
        %v186 = vld [vmem:[%s157 + $0x20] sm:$0xff]
        %v187 = vld [vmem:[%s157 + $0x28] sm:$0xff]
        %v188 = vld [vmem:[%s157 + $0x30] sm:$0xff]
        %v189 = vld [vmem:[%s157 + $0x38] sm:$0xff]
        %v190 = vld [vmem:[%s157 + $0x40] sm:$0xff]
        %v191 = vld [vmem:[%s157 + $0x48] sm:$0xff]
        %v192 = vld [vmem:[%s157 + $0x50] sm:$0xff]
        %v193 = vld [vmem:[%s157 + $0x58] sm:$0xff]
        %v194 = vld [vmem:[%s157 + $0x60] sm:$0xff]
        %v195 = vld [vmem:[%s157 + $0x68] sm:$0xff]
        %v196 = vld [vmem:[%s157 + $0x70] sm:$0xff]
        %v197 = vld [vmem:[%s157 + $0x78] sm:$0xff]
        %v198 = vld [vmem:[%s157 + $0x80] sm:$0xff]
        %v199 = vld [vmem:[%s157 + $0x88] sm:$0xff]
        %v200 = vld [vmem:[%s157 + $0x90] sm:$0xff]
        %v201 = vld [vmem:[%s157 + $0x98] sm:$0xff]
        %v202 = vld [vmem:[%s157 + $0xa0] sm:$0xff]
        %v203 = vld [vmem:[%s157 + $0xa8] sm:$0xff]
        %v204 = vld [vmem:[%s157 + $0xb0] sm:$0xff]
        %v205 = vld [vmem:[%s157 + $0xb8] sm:$0xff]
        %v206 = vld [vmem:[%s157 + $0xc0] sm:$0xff]
        %v207 = vld [vmem:[%s157 + $0xc8] sm:$0xff]
        %v208 = vld [vmem:[%s157 + $0xd0] sm:$0xff]
        %v209 = vld [vmem:[%s157 + $0xd8] sm:$0xff]
        %v210 = vld [vmem:[%s157 + $0xe0] sm:$0xff]
        %v211 = vld [vmem:[%s157 + $0xe8] sm:$0xff]
        %v212 = vld [vmem:[%s157 + $0xf0] sm:$0xff]
        %v213 = vld [vmem:[%s157 + $0xf8] sm:$0xff]
        %v246 = vunpack.c.l.b16 %v182
        %v247 = vunpack.c.h.b16 %v182
        %v248 = vunpack.c.l.b16 %v183
        %v249 = vunpack.c.h.b16 %v183
        %v250 = vunpack.c.l.b16 %v184
        %v251 = vunpack.c.h.b16 %v184
        %v252 = vunpack.c.l.b16 %v185
        %v253 = vunpack.c.h.b16 %v185
        %v254 = vunpack.c.l.b16 %v186
        %v255 = vunpack.c.h.b16 %v186
        %v256 = vunpack.c.l.b16 %v187
        %v257 = vunpack.c.h.b16 %v187
        %v258 = vunpack.c.l.b16 %v188
        %v259 = vunpack.c.h.b16 %v188
        %v260 = vunpack.c.l.b16 %v189
        %v261 = vunpack.c.h.b16 %v189
        %v262 = vunpack.c.l.b16 %v190
        %v263 = vunpack.c.h.b16 %v190
        %v264 = vunpack.c.l.b16 %v191
        %v265 = vunpack.c.h.b16 %v191
        %v266 = vunpack.c.l.b16 %v192
        %v267 = vunpack.c.h.b16 %v192
        %v268 = vunpack.c.l.b16 %v193
        %v269 = vunpack.c.h.b16 %v193
        %v270 = vunpack.c.l.b16 %v194
        %v271 = vunpack.c.h.b16 %v194
        %v272 = vunpack.c.l.b16 %v195
        %v273 = vunpack.c.h.b16 %v195
        %v274 = vunpack.c.l.b16 %v196
        %v275 = vunpack.c.h.b16 %v196
        %v276 = vunpack.c.l.b16 %v197
        %v277 = vunpack.c.h.b16 %v197
        %v278 = vunpack.c.l.b16 %v198
        %v279 = vunpack.c.h.b16 %v198
        %v280 = vunpack.c.l.b16 %v199
        %v281 = vunpack.c.h.b16 %v199
        %v282 = vunpack.c.l.b16 %v200
        %v283 = vunpack.c.h.b16 %v200
        %v284 = vunpack.c.l.b16 %v201
        %v285 = vunpack.c.h.b16 %v201
        %v286 = vunpack.c.l.b16 %v202
        %v287 = vunpack.c.h.b16 %v202
        %v288 = vunpack.c.l.b16 %v203
        %v289 = vunpack.c.h.b16 %v203
        %v290 = vunpack.c.l.b16 %v204
        %v291 = vunpack.c.h.b16 %v204
        %v292 = vunpack.c.l.b16 %v205
        %v293 = vunpack.c.h.b16 %v205
        %v294 = vunpack.c.l.b16 %v206
        %v295 = vunpack.c.h.b16 %v206
        %v296 = vunpack.c.l.b16 %v207
        %v297 = vunpack.c.h.b16 %v207
        %v298 = vunpack.c.l.b16 %v208
        %v299 = vunpack.c.h.b16 %v208
        %v300 = vunpack.c.l.b16 %v209
        %v301 = vunpack.c.h.b16 %v209
        %v302 = vunpack.c.l.b16 %v210
        %v303 = vunpack.c.h.b16 %v210
        %v304 = vunpack.c.l.b16 %v211
        %v305 = vunpack.c.h.b16 %v211
        %v306 = vunpack.c.l.b16 %v212
        %v307 = vunpack.c.h.b16 %v212
        %v308 = vunpack.c.l.b16 %v213
        %v309 = vunpack.c.h.b16 %v213
        %v310 = vpack.c.b16 %v250, %v246
        %v311 = vpack.c.b16 %v251, %v247
        %v312 = vpack.c.b16 %v252, %v248
        %v313 = vpack.c.b16 %v253, %v249
        %v314 = vpack.c.b16 %v258, %v254
        %v315 = vpack.c.b16 %v259, %v255
        %v316 = vpack.c.b16 %v260, %v256
        %v317 = vpack.c.b16 %v261, %v257
        %v318 = vpack.c.b16 %v266, %v262
        %v319 = vpack.c.b16 %v267, %v263
        %v320 = vpack.c.b16 %v268, %v264
        %v321 = vpack.c.b16 %v269, %v265
        %v322 = vpack.c.b16 %v274, %v270
        %v323 = vpack.c.b16 %v275, %v271
        %v324 = vpack.c.b16 %v276, %v272
        %v325 = vpack.c.b16 %v277, %v273
        %v326 = vpack.c.b16 %v282, %v278
        %v327 = vpack.c.b16 %v283, %v279
        %v328 = vpack.c.b16 %v284, %v280
        %v329 = vpack.c.b16 %v285, %v281
        %v330 = vpack.c.b16 %v290, %v286
        %v331 = vpack.c.b16 %v291, %v287
        %v332 = vpack.c.b16 %v292, %v288
        %v333 = vpack.c.b16 %v293, %v289
        %v334 = vpack.c.b16 %v298, %v294
        %v335 = vpack.c.b16 %v299, %v295
        %v336 = vpack.c.b16 %v300, %v296
        %v337 = vpack.c.b16 %v301, %v297
        %v338 = vpack.c.b16 %v306, %v302
        %v339 = vpack.c.b16 %v307, %v303
        %v340 = vpack.c.b16 %v308, %v304
        %v341 = vpack.c.b16 %v309, %v305
        %374 = vmatpush.bf16.msra.mxu0 %v338
        %375 = vmatpush.bf16.msra.mxu0 %v334
        %376 = vmatpush.bf16.msra.mxu0 %v330
        %377 = vmatpush.bf16.msra.mxu0 %v326
        %378 = vmatpush.bf16.msra.mxu0 %v322
        %379 = vmatpush.bf16.msra.mxu0 %v318
        %380 = vmatpush.bf16.msra.mxu0 %v314
        %381 = vmatpush.bf16.msra.mxu0 %v310
        %382 = vmatmul.bf16.gmra.mxu0 %v181
        %v383 = vpop.f32.mrf.mxu0
        %v384 = vadd.f32 0.0, %v383
        %v385 = vpop.f32.mrf.mxu0
        %386 = vdwg.mxu0
        %387 = vmatpush.bf16.msra.mxu0 %v339
        %388 = vmatpush.bf16.msra.mxu0 %v335
        %389 = vmatpush.bf16.msra.mxu0 %v331
        %390 = vmatpush.bf16.msra.mxu0 %v327
        %391 = vmatpush.bf16.msra.mxu0 %v323
        %392 = vmatpush.bf16.msra.mxu0 %v319
        %393 = vmatpush.bf16.msra.mxu0 %v315
        %394 = vmatpush.bf16.msra.mxu0 %v311
        %395 = vmatmul.bf16.gmra.mxu0 %v181
        %v396 = vpop.f32.mrf.mxu0
        %v397 = vadd.f32 0.0, %v396
        %v398 = vpop.f32.mrf.mxu0
        %399 = vdwg.mxu0
        %400 = vmatpush.bf16.msra.mxu0 %v340
        %401 = vmatpush.bf16.msra.mxu0 %v336
        %402 = vmatpush.bf16.msra.mxu0 %v332
        %403 = vmatpush.bf16.msra.mxu0 %v328
        %404 = vmatpush.bf16.msra.mxu0 %v324
        %405 = vmatpush.bf16.msra.mxu0 %v320
        %406 = vmatpush.bf16.msra.mxu0 %v316
        %407 = vmatpush.bf16.msra.mxu0 %v312
        %408 = vmatmul.bf16.gmra.mxu0 %v181
        %v409 = vpop.f32.mrf.mxu0
        %v410 = vadd.f32 0.0, %v409
        %v411 = vpop.f32.mrf.mxu0
        %412 = vdwg.mxu0
        %413 = vmatpush.bf16.msra.mxu0 %v341
        %414 = vmatpush.bf16.msra.mxu0 %v337
        %415 = vmatpush.bf16.msra.mxu0 %v333
        %416 = vmatpush.bf16.msra.mxu0 %v329
        %417 = vmatpush.bf16.msra.mxu0 %v325
        %418 = vmatpush.bf16.msra.mxu0 %v321
        %419 = vmatpush.bf16.msra.mxu0 %v317
        %420 = vmatpush.bf16.msra.mxu0 %v313
        %421 = vmatmul.bf16.gmra.mxu0 %v181
        %v422 = vpop.f32.mrf.mxu0
        %v423 = vadd.f32 0.0, %v422
        %v424 = vpop.f32.mrf.mxu0
        %425 = vdwg.mxu0
        %426 = vst [vmem:[%s178] sm:$0xff] %v384
        %427 = vst [vmem:[%s178 + $0x8] sm:$0xff] %v397
        %428 = vst [vmem:[%s178 + $0x10] sm:$0xff] %v410
        %429 = vst [vmem:[%s178 + $0x18] sm:$0xff] %v423
        %s430 = sand.u32 %s75, 1
        %s431 = scalar_lea.sflag [#allocation4], %s430
        %s432 = sand.u32 %s75, 1
        %s433 = smul.addr %s432, 32
        %s434 = scalar_lea.vmem [#allocation7], %s433
        // Predicated region
        $region37: #{tpu_custom_call.1} parent=27 // pred_check
          %p435 = pneg %p85
        $region38: #{tpu_custom_call.1} parent=27 // pred_check_branch
          %437 = sbr.rel (%p435) target = $region40
        $region39: #{tpu_custom_call.1} parent=27 // pred_region
          %s438 = smul.u32 4, %s20
          %440 = vsyncadd %s431, 0
          %s441 = smul.addr %s438, 8
          %s442 = scalar_lea.hbm %s2, %s441
          %s444 = sshll.u32 %s434, 4
          %s445 = int_to_ptr.vmem [resolvable:$true] %s444
          %s446 = sshll.u32 %s442, 4
          %s447 = int_to_ptr.hbm [resolvable:$true] %s446
          %449 = dma.vmem_to_hbm [thread:$0]  %s445, 512, %s447, %s431
        $region40: #{tpu_custom_call.1} parent=27 // pred_fallthru
          _
      $region28: #{tpu_custom_call.1} parent=5 // pred_fallthru
        _
      %p450 = scmp.le.s32.totalorder 2, %s15
      // Predicated region
      $region41: #{tpu_custom_call.1} parent=5 // pred_check
        %p451 = pneg %p450
      $region42: #{tpu_custom_call.1} parent=5 // pred_check_branch
        %453 = sbr.rel (%p451) target = $region44
      $region43: #{tpu_custom_call.1} parent=5 // pred_region
        %s454 = ssub.s32 %s15, 2
        // Predicated region
        $region45: #{tpu_custom_call.1} parent=43 // pred_check
          %p455 = pneg %p91
        $region46: #{tpu_custom_call.1} parent=43 // pred_check_branch
          %457 = sbr.rel (%p455) target = $region48
        $region47: #{tpu_custom_call.1} parent=43 // pred_region
          %s458 = sand.u32 %s76, 1
          %s459 = scalar_lea.sflag [#allocation4], %s458
          %s460 = sand.u32 %s76, 1
          %s461 = smul.addr %s460, 32
          %s462 = scalar_lea.vmem [#allocation7], %s461
          %464 = dma.done %s459, 512
        $region48: #{tpu_custom_call.1} parent=43 // pred_fallthru
          _
      $region44: #{tpu_custom_call.1} parent=5 // pred_fallthru
        _
    $region6: #{tpu_custom_call.1} parent=1 // loop_footer
      %s19 = sadd.s32 1, %s15
    $region7: #{tpu_custom_call.1} parent=1 // loop_footer_branch
      %14 = sbr.rel target = $region3
    $region8: #{tpu_custom_call.1} parent=1 // loop_exit
      _
    %465 = vsyncpa [#allocation3], 1
    %s466 = scalar_lea.sflag [#allocation3], 1
    %467 = vsyncpa %s466, 1
    %468 = vsyncpa [#allocation6], 1
    %s469 = scalar_lea.sflag [#allocation6], 1
    %470 = vsyncpa %s469, 1
    %471 = vsyncpa [#allocation4], 1
    %s472 = scalar_lea.sflag [#allocation4], 1
    %473 = vsyncpa %s472, 1

</llo_original>
